<compile_context>
chip_gen: v5e
topology: v5e:2x2
jax: 0.10.0
libtpu: 0.0.40
codegen_flags: <defaults>
</compile_context>

<pallas_src>
import jax
import jax.numpy as jnp
from jax.experimental import pallas as pl
from jax.experimental.pallas import tpu as pltpu


# --------------------------------------------------------------------------
# 1. BWtoRGB : out[:, k*W:(k+1)*W] = x  (k = 0,1,2) on a lane-dense 2D view.
# --------------------------------------------------------------------------
def _replicate3_kernel(x_ref, o_ref):
    # x_ref: (tile_outer, W) -> o_ref: (tile_outer, 3*W)
    x = x_ref[...]
    w = x.shape[1]
    o_ref[:, 0 * w:1 * w] = x
    o_ref[:, 1 * w:2 * w] = x
    o_ref[:, 2 * w:3 * w] = x


def _choose_tile_outer(outer, row_bytes):
    """Rows per grid step: ~2 MiB input block, multiple of 8, capped at outer."""
    target_bytes = 2 * 1024 * 1024
    t = max(1, target_bytes // max(row_bytes, 1))
    t = (t // 8) * 8
    if t < 8:
        t = 8
    return outer if t >= outer else t


def _replicate3_pallas(x2d):
    outer, w = x2d.shape
    row_bytes = w * x2d.dtype.itemsize
    tile_outer = _choose_tile_outer(outer, row_bytes)
    grid = (pl.cdiv(outer, tile_outer),)

    cost = pl.CostEstimate(
        flops=0,
        transcendentals=0,
        bytes_accessed=4 * x2d.size * x2d.dtype.itemsize,  # 1x read + 3x write
    )

    return pl.pallas_call(
        _replicate3_kernel,
        out_shape=jax.ShapeDtypeStruct((outer, 3 * w), x2d.dtype),
        grid_spec=pltpu.PrefetchScalarGridSpec(
            num_scalar_prefetch=0,
            grid=grid,
            in_specs=[pl.BlockSpec((tile_outer, w), lambda i: (i, 0))],
            out_specs=pl.BlockSpec((tile_outer, 3 * w), lambda i: (i, 0)),
        ),
        compiler_params=pltpu.CompilerParams(
            dimension_semantics=("parallel",)),
        cost_estimate=cost,
    )(x2d)


def bw_to_rgb(x):
    """JAX/Pallas equivalent of BWtoRGB.forward."""
    if x.ndim < 3:
        raise ValueError(
            "BWtoRGB expects rank >= 3 input (got shape {})".format(x.shape))
    chan_dim = 1 if x.ndim == 4 else 2
    chans = x.shape[chan_dim]
    if chans >= 3:
        return x

    outer = 1
    for d in x.shape[:chan_dim]:
        outer *= d
    width = 1
    for d in x.shape[chan_dim:]:
        width *= d  # includes the channel dim: width = C * trailing

    x2d = x.reshape(outer, width)
    y2d = _replicate3_pallas(x2d)
    out_shape = x.shape[:chan_dim] + (3 * chans,) + x.shape[chan_dim + 1:]
    return y2d.reshape(out_shape)


# --------------------------------------------------------------------------
# 2. Fused BWtoRGB + bilinear Upsample(size=[224,224], align_corners=True).
#    Separable resize as two matmuls: out = A_h @ img @ A_w^T.
# --------------------------------------------------------------------------
def _interp_matrix(out_size, in_size):
    """(out_size, in_size) f32 bilinear interpolation matrix, align_corners=True."""
    if in_size == 1:
        return jnp.ones((out_size, 1), jnp.float32)
    pos = jnp.arange(out_size, dtype=jnp.float32) * (
        (in_size - 1) / (out_size - 1))
    low = jnp.clip(jnp.floor(pos).astype(jnp.int32), 0, in_size - 2)
    frac = pos - low.astype(jnp.float32)
    rows = jnp.arange(out_size)
    m = jnp.zeros((out_size, in_size), jnp.float32)
    m = m.at[rows, low].set(1.0 - frac)
    m = m.at[rows, low + 1].add(frac)
    return m


def _upsample_kernel(ah_ref, x_ref, awt_ref, o_ref):
    x = x_ref[0, 0].astype(jnp.float32)                                # (H, W)
    tmp = jnp.dot(ah_ref[...], x, preferred_element_type=jnp.float32)  # (OH, W)
    out = jnp.dot(tmp, awt_ref[...],
                  preferred_element_type=jnp.float32)                  # (OH, OW)
    o_ref[0, 0] = out.astype(o_ref.dtype)


def bw_to_rgb_upsample(x, out_hw=(224, 224)):
    """Fused BWtoRGB + nn.Upsample(size=out_hw, mode='bilinear', align_corners=True)
    for a 4D NCHW input.  Channel replication is folded into the index_map."""
    assert x.ndim == 4, "expected NCHW input"
    n, c_in, h, w = x.shape
    oh, ow = out_hw
    c_out = c_in if c_in >= 3 else 3

    a_h = _interp_matrix(oh, h)        # (OH, H)
    a_wt = _interp_matrix(ow, w).T     # (W, OW)

    if c_in >= 3:
        x_map = lambda nn_, cc: (nn_, cc, 0, 0)
    elif c_in == 1:
        x_map = lambda nn_, cc: (nn_, 0, 0, 0)
    else:  # 1 < c_in < 3: torch.cat([x,x,x],1) interleaves -> out chan j <- j % c_in
        x_map = lambda nn_, cc: (nn_, cc % c_in, 0, 0)

    flops_per_img = 2 * (oh * h * w + oh * ow * w)
    cost = pl.CostEstimate(
        flops=flops_per_img * n * c_out,
        transcendentals=0,
        bytes_accessed=(n * c_out * h * w + n * c_out * oh * ow) * x.dtype.itemsize,
    )

    return pl.pallas_call(
        _upsample_kernel,
        out_shape=jax.ShapeDtypeStruct((n, c_out, oh, ow), x.dtype),
        grid_spec=pltpu.PrefetchScalarGridSpec(
            num_scalar_prefetch=0,
            grid=(n, c_out),
            in_specs=[
                pl.BlockSpec((oh, h), lambda nn_, cc: (0, 0)),
                pl.BlockSpec((1, 1, h, w), x_map),
                pl.BlockSpec((w, ow), lambda nn_, cc: (0, 0)),
            ],
            out_specs=pl.BlockSpec((1, 1, oh, ow), lambda nn_, cc: (nn_, cc, 0, 0)),
        ),
        compiler_params=pltpu.CompilerParams(
            dimension_semantics=("parallel", "parallel")),
        cost_estimate=cost,
    )(a_h, x, a_wt)


# --------------------------------------------------------------------------
# 3. Fused projection head (inference): BN1d -> ReLU -> Linear -> BN1d -> ReLU -> Linear
# --------------------------------------------------------------------------
def _proj_head_kernel(x_ref, s1_ref, b1_ref, w1_ref, c1_ref,
                      s2_ref, b2_ref, w2_ref, c2_ref, o_ref):
    x = x_ref[...].astype(jnp.float32)
    h = jnp.maximum(x * s1_ref[...] + b1_ref[...], 0.0)
    h = jnp.dot(h, w1_ref[...], preferred_element_type=jnp.float32) + c1_ref[...]
    h = jnp.maximum(h * s2_ref[...] + b2_ref[...], 0.0)
    out = jnp.dot(h, w2_ref[...], preferred_element_type=jnp.float32) + c2_ref[...]
    o_ref[...] = out.astype(o_ref.dtype)


def proj_head(logits, params, eps=1e-5):
    """Fused `proj` from MultiBatchModule.get_model (eval-mode BatchNorm)."""
    b, latent = logits.shape
    out_size = params["w2"].shape[0]

    # Fold BatchNorm1d into per-feature scale/shift.
    s1 = (params["g1"] / jnp.sqrt(params["v1"] + eps)).astype(jnp.float32)
    sh1 = (params["beta1"] - params["m1"] * s1).astype(jnp.float32)
    s2 = (params["g2"] / jnp.sqrt(params["v2"] + eps)).astype(jnp.float32)
    sh2 = (params["beta2"] - params["m2"] * s2).astype(jnp.float32)

    args = (
        logits,
        s1.reshape(1, latent), sh1.reshape(1, latent),
        params["w1"].T.astype(jnp.float32),            # (latent, latent)
        params["bias1"].reshape(1, latent).astype(jnp.float32),
        s2.reshape(1, latent), sh2.reshape(1, latent),
        params["w2"].T.astype(jnp.float32),            # (latent, out_size)
        params["bias2"].reshape(1, out_size).astype(jnp.float32),
    )

    def full_spec(shape):
        return pl.BlockSpec(shape, lambda i: (0,) * len(shape))

    return pl.pallas_call(
        _proj_head_kernel,
        out_shape=jax.ShapeDtypeStruct((b, out_size), logits.dtype),
        grid_spec=pltpu.PrefetchScalarGridSpec(
            num_scalar_prefetch=0,
            grid=(1,),
            in_specs=[full_spec(a.shape) for a in args],
            out_specs=full_spec((b, out_size)),
        ),
        compiler_params=pltpu.CompilerParams(
            dimension_semantics=("arbitrary",)),
    )(*args)


def _proj_head_ref(x, params, eps=1e-5):
    s1 = params["g1"] / jnp.sqrt(params["v1"] + eps)
    h = jnp.maximum(x * s1 + (params["beta1"] - params["m1"] * s1), 0.0)
    h = h @ params["w1"].T + params["bias1"]
    s2 = params["g2"] / jnp.sqrt(params["v2"] + eps)
    h = jnp.maximum(h * s2 + (params["beta2"] - params["m2"] * s2), 0.0)
    return h @ params["w2"].T + params["bias2"]


# --------------------------------------------------------------------------
if __name__ == "__main__":
    key = jax.random.PRNGKey(0)
    ks = jax.random.split(key, 12)

    # --- BWtoRGB, 4D NCHW grayscale: (2, 1, 16, 16) -> (2, 3, 16, 16) ---
    x = jax.random.normal(ks[0], (2, 1, 16, 16), dtype=jnp.float32)
    y = jax.block_until_ready(bw_to_rgb(x))
    ref = jnp.concatenate([x, x, x], axis=1)
    assert y.shape == (2, 3, 16, 16) and y.dtype == x.dtype
    assert jnp.array_equal(y, ref)

    # --- BWtoRGB, 5D multi-crop: (2, 3, 2, 8, 8) -> chan_dim=2 -> (2, 3, 6, 8, 8) ---
    x5 = jax.random.normal(ks[1], (2, 3, 2, 8, 8), dtype=jnp.float32)
    y5 = jax.block_until_ready(bw_to_rgb(x5))
    ref5 = jnp.concatenate([x5, x5, x5], axis=2)
    assert y5.shape == (2, 3, 6, 8, 8)
    assert jnp.array_equal(y5, ref5)

    # --- Pass-through case (channels >= 3): no kernel runs ---
    x_rgb = jax.random.normal(ks[2], (2, 4, 16, 16), dtype=jnp.float32)
    y_rgb = jax.block_until_ready(bw_to_rgb(x_rgb))
    assert jnp.array_equal(y_rgb, x_rgb)

    # --- Fused BWtoRGB + bilinear Upsample(224x224, align_corners=True) ---
    up = jax.block_until_ready(bw_to_rgb_upsample(x, out_hw=(224, 224)))
    assert up.shape == (2, 3, 224, 224) and up.dtype == x.dtype
    a_h = _interp_matrix(224, 16)
    a_w = _interp_matrix(224, 16)
    rep = jnp.concatenate([x, x, x], axis=1)
    up_ref = jnp.einsum("oh,nchw,pw->ncop", a_h, rep, a_w)
    assert jnp.allclose(up, up_ref, rtol=1e-5, atol=1e-5)
    # align_corners=True: corners reproduce the source corners exactly-ish.
    assert jnp.allclose(up[..., 0, 0], rep[..., 0, 0], atol=1e-5)
    assert jnp.allclose(up[..., -1, -1], rep[..., -1, -1], atol=1e-5)

    # --- Fused projection head: (2, 256) -> (2, 16) ---
    latent, out_size = 256, 16
    logits = jax.random.normal(ks[3], (2, latent), dtype=jnp.float32)
    params = dict(
        g1=1.0 + 0.1 * jax.random.normal(ks[4], (latent,), jnp.float32),
        beta1=0.1 * jax.random.normal(ks[5], (latent,), jnp.float32),
        m1=0.1 * jax.random.normal(ks[6], (latent,), jnp.float32),
        v1=jnp.abs(jax.random.normal(ks[7], (latent,), jnp.float32)) + 0.5,
        w1=jax.random.normal(ks[8], (latent, latent), jnp.float32) * 0.05,
        bias1=0.1 * jax.random.normal(ks[9], (latent,), jnp.float32),
        g2=jnp.ones((latent,), jnp.float32),
        beta2=jnp.zeros((latent,), jnp.float32),
        m2=jnp.zeros((latent,), jnp.float32),
        v2=jnp.ones((latent,), jnp.float32),
        w2=jax.random.normal(ks[10], (out_size, latent), jnp.float32) * 0.05,
        bias2=0.1 * jax.random.normal(ks[11], (out_size,), jnp.float32),
    )
    out = jax.block_until_ready(proj_head(logits, params))
    out_ref = _proj_head_ref(logits, params)
    assert out.shape == (2, out_size)
    assert jnp.allclose(out, out_ref, rtol=1e-4, atol=1e-4)

    # TODO(synk): ResNet/VGG backbone and the gradient-checkpointed multi-crop
    # accumulation loop of MultiBatchModule.forward are not translated.

    print("KERNEL_OK")
</pallas_src>

<mosaic_0001>
module attributes {stable_mosaic.version = 11 : i64} {
  func.func @_replicate3_kernel(%arg0: i32, %arg1: memref<2x256xf32, #tpu.memory_space<vmem>>, %arg2: memref<2x768xf32, #tpu.memory_space<vmem>>) attributes {dimension_semantics = [#tpu.dimension_semantics<parallel>], iteration_bounds = array<i64: 1>, scalar_prefetch = 0 : i64, scratch_operands = 0 : i64, tpu.core_type = #tpu.core_type<tc>, window_params = [{transform_indices = @transform_0, window_bounds = array<i64: 2, 256>}, {transform_indices = @transform_1, window_bounds = array<i64: 2, 768>}]} {
    %c0 = arith.constant 0 : index
    %c0_0 = arith.constant 0 : index
    %0 = vector.load %arg1[%c0, %c0_0] : memref<2x256xf32, #tpu.memory_space<vmem>>, vector<2x256xf32>
    %c0_1 = arith.constant 0 : index
    %c0_2 = arith.constant 0 : index
    %1 = vector.load %arg2[%c0_1, %c0_2] : memref<2x768xf32, #tpu.memory_space<vmem>>, vector<2x256xf32>
    tpu.vector_store %arg2[%c0_1, %c0_2], %0 {strides = array<i32>} : memref<2x768xf32, #tpu.memory_space<vmem>>, vector<2x256xf32>,
    %c0_3 = arith.constant 0 : index
    %c256 = arith.constant 256 : index
    %2 = vector.load %arg2[%c0_3, %c256] : memref<2x768xf32, #tpu.memory_space<vmem>>, vector<2x256xf32>
    tpu.vector_store %arg2[%c0_3, %c256], %0 {strides = array<i32>} : memref<2x768xf32, #tpu.memory_space<vmem>>, vector<2x256xf32>,
    %c0_4 = arith.constant 0 : index
    %c512 = arith.constant 512 : index
    %3 = vector.load %arg2[%c0_4, %c512] : memref<2x768xf32, #tpu.memory_space<vmem>>, vector<2x256xf32>
    tpu.vector_store %arg2[%c0_4, %c512], %0 {strides = array<i32>} : memref<2x768xf32, #tpu.memory_space<vmem>>, vector<2x256xf32>,
    return
  }
  func.func @transform_0(%arg0: i32) -> (i32, i32) {
    %c0_i32 = arith.constant 0 : i32
    %c0_i32_0 = arith.constant 0 : i32
    return %arg0, %c0_i32 : i32, i32
  }
  func.func @transform_1(%arg0: i32) -> (i32, i32) {
    %c0_i32 = arith.constant 0 : i32
    %c0_i32_0 = arith.constant 0 : i32
    return %arg0, %c0_i32 : i32, i32
  }
}

</mosaic_0001>

<llo_original>
// kernel: tpu_custom_call.1
$region0: #{tpu_custom_call.1}
  #allocation0 [shape = 'u32[]', space=smem, size = 0x4, offset = 0x4, fixed_abs, tag = 'smem constant byte address 0x4 - core index']
  #allocation1 [shape = 'u32[72,128]{1,0:T(1,128)}', space=vmem, size = 0x9000, scoped, tag = 'internal scratch']
  %s0 = inlined_call_operand.hbm [shape: f32[2,256], index: 0, kind: input, shape index: {}]
  %s1 = inlined_call_operand.hbm [shape: f32[2,768], index: 1, kind: output, shape index: {}]
  %s2 = sld [smem:[#allocation0]]
  $region18: #{tpu_custom_call.1} parent=0
    _
  %s4 = ssub.s32 1, %s2
  %s5 = scalar_select 0, %s4, %s2
  $region1: #{tpu_custom_call.1} parent=0
    #allocation2 [shape = 'u8[2048]{0}', space=vmem, size = 0x800, scoped, tag = 'input window, operand 0, single buffered']
    #allocation3 [shape = 's32[1]{0}', space=sflag, size = 0x4, scoped, tag = 'scoped memory for tpu_custom_call.1']
    #allocation4 [shape = 's32[1]{0}', space=sflag, size = 0x4, scoped, tag = 'scoped memory for tpu_custom_call.1']
    #allocation5 [shape = 'u8[6144]{0}', space=vmem, size = 0x1800, scoped, tag = 'output window, operand 0, single buffered']
    %6 = vsyncpa [#allocation3], 0
    %7 = vsyncpa [#allocation4], 0
    // Predicated region
    $region2: #{tpu_custom_call.1} parent=1 // pred_check
      _
    $region3: #{tpu_custom_call.1} parent=1 // pred_check_branch
      %9 = sbr.rel (0) target = $region5
    $region4: #{tpu_custom_call.1} parent=1 // pred_region
      %11 = vsyncadd [#allocation3], 0
      %s13 = sshll.u32 %s0, 4
      %s14 = int_to_ptr.hbm [resolvable:$true] %s13
      %s15 = sshll.u32 [#allocation2], 4
      %s16 = int_to_ptr.vmem [resolvable:$true] %s15
      %18 = dma.hbm_to_vmem [thread:$0]  %s14, 64, %s16, [#allocation3]
    $region5: #{tpu_custom_call.1} parent=1 // pred_fallthru
      _
    // Predicated region
    $region6: #{tpu_custom_call.1} parent=1 // pred_check
      _
    $region7: #{tpu_custom_call.1} parent=1 // pred_check_branch
      %20 = sbr.rel (0) target = $region9
    $region8: #{tpu_custom_call.1} parent=1 // pred_region
      %22 = dma.done [#allocation3], 64
    $region9: #{tpu_custom_call.1} parent=1 // pred_fallthru
      _
    %v23 = vld [vmem:[#allocation2] sm:$0xf]
    %24 = vst [vmem:[#allocation5] sm:$0xf] %v23
    %25 = vst [vmem:[#allocation5 + $0x4] sm:$0xf] %v23
    %26 = vst [vmem:[#allocation5 + $0x8] sm:$0xf] %v23
    // Predicated region
    $region10: #{tpu_custom_call.1} parent=1 // pred_check
      _
    $region11: #{tpu_custom_call.1} parent=1 // pred_check_branch
      %28 = sbr.rel (0) target = $region13
    $region12: #{tpu_custom_call.1} parent=1 // pred_region
      %30 = vsyncadd [#allocation4], 0
      %s32 = sshll.u32 [#allocation5], 4
      %s33 = int_to_ptr.vmem [resolvable:$true] %s32
      %s34 = sshll.u32 %s1, 4
      %s35 = int_to_ptr.hbm [resolvable:$true] %s34
      %37 = dma.vmem_to_hbm [thread:$0]  %s33, 192, %s35, [#allocation4]
    $region13: #{tpu_custom_call.1} parent=1 // pred_fallthru
      _
    // Predicated region
    $region14: #{tpu_custom_call.1} parent=1 // pred_check
      _
    $region15: #{tpu_custom_call.1} parent=1 // pred_check_branch
      %39 = sbr.rel (0) target = $region17
    $region16: #{tpu_custom_call.1} parent=1 // pred_region
      %41 = dma.done [#allocation4], 192
    $region17: #{tpu_custom_call.1} parent=1 // pred_fallthru
      _
    %42 = vsyncpa [#allocation3], 1
    %43 = vsyncpa [#allocation4], 1

</llo_original>
